<compile_context>
chip_gen: v6e
topology: v6e:2x2x1
jax: 0.10.0
libtpu: 0.0.40
codegen_flags: <defaults>
</compile_context>

<pallas_src>
import jax
import jax.numpy as jnp
from jax.experimental import pallas as pl
from jax.experimental.pallas import tpu as pltpu

MAX_LEN = 128   # fixed token-code length per string (sublane-friendly)
TILE_N = 512    # batch tile: multiple of 128 (v5e MXU) and 256 (v6e/v7x MXU)


def _sentiment_kernel(w_ref, x_ref, o_ref):
    # w_ref: (1, L)      f32 in VMEM (resident across all grid steps)
    # x_ref: (L, TILE_N) bf16 in VMEM (one batch tile, batch on lanes)
    # o_ref: (1, TILE_N) f32 in VMEM (lane-dense output -> unmasked stores)
    scores = jnp.dot(
        w_ref[...].astype(jnp.bfloat16),   # bf16 x bf16 MXU inputs
        x_ref[...],
        preferred_element_type=jnp.float32,  # f32 accumulate
    )
    o_ref[...] = jnp.tanh(scores)            # f32 tanh on EUP


def sentiment_forward(x_codes: jnp.ndarray, w: jnp.ndarray,
                      *, tile_n: int = TILE_N) -> jnp.ndarray:
    """x_codes: (N, MAX_LEN) float, w: (MAX_LEN,) or (MAX_LEN, 1) -> (N,) f32."""
    n, l = x_codes.shape
    assert l == MAX_LEN, f"expected token length {MAX_LEN}, got {l}"

    # Pad batch to a multiple of tile_n with zero rows (discarded at the end).
    n_pad = tile_n * pl.cdiv(n, tile_n)
    x_padded = jnp.zeros((n_pad, l), dtype=jnp.bfloat16)
    x_padded = x_padded.at[:n].set(x_codes.astype(jnp.bfloat16))
    # Layout plumbing: batch on the lane axis -> (L, N_pad).
    x_t = x_padded.T
    w_row = jnp.reshape(w.astype(jnp.float32), (1, l))

    grid = (n_pad // tile_n,)
    out = pl.pallas_call(
        _sentiment_kernel,
        out_shape=jax.ShapeDtypeStruct((1, n_pad), jnp.float32),
        grid_spec=pltpu.PrefetchScalarGridSpec(
            num_scalar_prefetch=0,
            grid=grid,
            in_specs=[
                pl.BlockSpec((1, l), lambda i: (0, 0)),        # w: resident
                pl.BlockSpec((l, tile_n), lambda i: (0, i)),   # x: batch tile
            ],
            out_specs=pl.BlockSpec((1, tile_n), lambda i: (0, i)),
        ),
        compiler_params=pltpu.CompilerParams(
            # batch axis is independent -> shard across TCs on v7x megacore
            dimension_semantics=("parallel",),
        ),
        cost_estimate=pl.CostEstimate(
            flops=2 * n_pad * l,
            transcendentals=n_pad,
            bytes_accessed=n_pad * l * 2 + l * 4 + n_pad * 4,
        ),
    )(w_row, x_t)
    return out[0, :n]


def encode_strings(strings, max_len=MAX_LEN):
    """Glue: python strings -> padded (N, max_len) float32 code array in [0, 1]."""
    rows = []
    for s in strings:
        codes = [float(b) / 255.0 for b in s.encode("utf-8")[:max_len]]
        codes += [0.0] * (max_len - len(codes))
        rows.append(codes)
    return jnp.asarray(rows, dtype=jnp.float32)


if __name__ == "__main__":
    # Deterministic example inputs: a small batch of strings (N = 2).
    x_strings = [
        "this movie was absolutely wonderful",
        "terrible plot and worse acting",
    ]
    x_codes = encode_strings(x_strings)  # (2, 128) float32

    # Deterministic synthetic "sentiment head" parameters.
    key = jax.random.PRNGKey(0)
    w = jax.random.normal(key, (MAX_LEN, 1), dtype=jnp.float32) * 0.05

    out = sentiment_forward(x_codes, w)  # (2,) float32, one scalar per sample
    jax.block_until_ready(out)
    assert out.shape == (len(x_strings),)
    assert bool(jnp.all(jnp.isfinite(out)))
    print("KERNEL_OK")
</pallas_src>

<mosaic_0001>
module attributes {stable_mosaic.version = 11 : i64} {
  func.func @_sentiment_kernel(%arg0: i32, %arg1: memref<1x128xf32, #tpu.memory_space<vmem>>, %arg2: memref<128x512xbf16, #tpu.memory_space<vmem>>, %arg3: memref<1x512xf32, #tpu.memory_space<vmem>>) attributes {dimension_semantics = [#tpu.dimension_semantics<parallel>], iteration_bounds = array<i64: 1>, scalar_prefetch = 0 : i64, scratch_operands = 0 : i64, tpu.core_type = #tpu.core_type<tc>, window_params = [{pipeline_mode = #tpu.pipeline_mode<synchronous>, transform_indices = @transform_0, window_bounds = array<i64: 1, 128>}, {transform_indices = @transform_1, window_bounds = array<i64: 128, 512>}, {transform_indices = @transform_2, window_bounds = array<i64: 1, 512>}]} {
    %c0 = arith.constant 0 : index
    %c0_0 = arith.constant 0 : index
    %0 = vector.load %arg1[%c0, %c0_0] : memref<1x128xf32, #tpu.memory_space<vmem>>, vector<1x128xf32>
    %1 = arith.truncf %0 : vector<1x128xf32> to vector<1x128xbf16>
    %c0_1 = arith.constant 0 : index
    %c0_2 = arith.constant 0 : index
    %2 = vector.load %arg2[%c0_1, %c0_2] : memref<128x512xbf16, #tpu.memory_space<vmem>>, vector<128x512xbf16>
    %cst = arith.constant dense<0.000000e+00> : vector<1x512xf32>
    %3 = tpu.matmul %1, %2, %cst {dimension_numbers = #tpu.dot_dimension_numbers<[1], [0], [0], [1], [0, 0, 1, 1], [], []>} : vector<1x128xbf16>, vector<128x512xbf16>, vector<1x512xf32> -> vector<1x512xf32>
    %4 = math.tanh %3 : vector<1x512xf32>
    %c0_3 = arith.constant 0 : index
    %c0_4 = arith.constant 0 : index
    %5 = vector.load %arg3[%c0_3, %c0_4] : memref<1x512xf32, #tpu.memory_space<vmem>>, vector<1x512xf32>
    tpu.vector_store %arg3[%c0_3, %c0_4], %4 {strides = array<i32>} : memref<1x512xf32, #tpu.memory_space<vmem>>, vector<1x512xf32>,
    return
  }
  func.func @transform_0(%arg0: i32) -> (i32, i32) {
    %c0_i32 = arith.constant 0 : i32
    %c0_i32_0 = arith.constant 0 : i32
    %c0_i32_1 = arith.constant 0 : i32
    return %c0_i32, %c0_i32_0 : i32, i32
  }
  func.func @transform_1(%arg0: i32) -> (i32, i32) {
    %c0_i32 = arith.constant 0 : i32
    %c0_i32_0 = arith.constant 0 : i32
    return %c0_i32, %arg0 : i32, i32
  }
  func.func @transform_2(%arg0: i32) -> (i32, i32) {
    %c0_i32 = arith.constant 0 : i32
    %c0_i32_0 = arith.constant 0 : i32
    return %c0_i32, %arg0 : i32, i32
  }
}

</mosaic_0001>

<llo_original>
// kernel: tpu_custom_call.1
$region0: #{tpu_custom_call.1}
  #allocation0 [shape = 'u32[]', space=smem, size = 0x4, offset = 0x4, fixed_abs, tag = 'smem constant byte address 0x4 - core index']
  #allocation1 [shape = 'u32[144,128]{1,0:T(1,128)}', space=vmem, size = 0x12000, scoped, tag = 'internal scratch']
  %s0 = inlined_call_operand.hbm [shape: f32[1,128], index: 0, kind: input, shape index: {}]
  %s1 = inlined_call_operand.hbm [shape: bf16[128,512], index: 1, kind: input, shape index: {}]
  %s2 = inlined_call_operand.hbm [shape: f32[1,512], index: 2, kind: output, shape index: {}]
  %s3 = sld [smem:[#allocation0]]
  $region26: #{tpu_custom_call.1} parent=0
    _
  %s5 = ssub.s32 1, %s3
  %s6 = scalar_select 0, %s5, %s3
  $region1: #{tpu_custom_call.1} parent=0
    #allocation2 [shape = 'u8[512]{0}', space=vmem, size = 0x400, scoped, tag = 'input window, operand 0, single buffered']
    #allocation3 [shape = 's32[1]{0}', space=sflag, size = 0x4, scoped, tag = 'scoped memory for tpu_custom_call.1']
    #allocation4 [shape = 's32[1]{0}', space=sflag, size = 0x4, scoped, tag = 'scoped memory for tpu_custom_call.1']
    #allocation5 [shape = 'u8[131072]{0}', space=vmem, size = 0x20000, scoped, tag = 'input window, operand 1, single buffered']
    #allocation6 [shape = 's32[1]{0}', space=sflag, size = 0x4, scoped, tag = 'scoped memory for tpu_custom_call.1']
    #allocation7 [shape = 'u8[2048]{0}', space=vmem, size = 0x800, scoped, tag = 'output window, operand 0, single buffered']
    %7 = vsyncpa [#allocation3], 0
    %8 = vsyncpa [#allocation6], 0
    %9 = vsyncpa [#allocation4], 0
    // Predicated region
    $region2: #{tpu_custom_call.1} parent=1 // pred_check
      _
    $region3: #{tpu_custom_call.1} parent=1 // pred_check_branch
      %11 = sbr.rel (0) target = $region5
    $region4: #{tpu_custom_call.1} parent=1 // pred_region
      %s13 = ssub.s32 16, 16
      %14 = vsyncadd [#allocation3], %s13
      %s16 = sshll.u32 [#allocation2], 4
      %s17 = int_to_ptr.vmem [resolvable:$true] %s16
      %19 = dma.hbm_to_vmem [thread:$0]  %s0, 16, %s17, [#allocation3]
    $region5: #{tpu_custom_call.1} parent=1 // pred_fallthru
      _
    // Predicated region
    $region6: #{tpu_custom_call.1} parent=1 // pred_check
      _
    $region7: #{tpu_custom_call.1} parent=1 // pred_check_branch
      %21 = sbr.rel (0) target = $region9
    $region8: #{tpu_custom_call.1} parent=1 // pred_region
      %s23 = ssub.s32 4096, 4096
      %24 = vsyncadd [#allocation6], %s23
      %s25 = sshll.u32 [#allocation5], 4
      %s26 = int_to_ptr.vmem [resolvable:$true] %s25
      %31 = dma.hbm_to_vmem [thread:$0]  %s1, 4096, %s26, [#allocation6], 256, 256, 16
    $region9: #{tpu_custom_call.1} parent=1 // pred_fallthru
      _
    // Predicated region
    $region10: #{tpu_custom_call.1} parent=1 // pred_check
      _
    $region11: #{tpu_custom_call.1} parent=1 // pred_check_branch
      %33 = sbr.rel (0) target = $region13
    $region12: #{tpu_custom_call.1} parent=1 // pred_region
      %34 = dma.done [#allocation3], 16
    $region13: #{tpu_custom_call.1} parent=1 // pred_fallthru
      _
    // Predicated region
    $region14: #{tpu_custom_call.1} parent=1 // pred_check
      _
    $region15: #{tpu_custom_call.1} parent=1 // pred_check_branch
      %36 = sbr.rel (0) target = $region17
    $region16: #{tpu_custom_call.1} parent=1 // pred_region
      %37 = dma.done [#allocation6], 4096
    $region17: #{tpu_custom_call.1} parent=1 // pred_fallthru
      _
    %v39 = vld [vmem:[#allocation2] sm:$0x1]
    %v40 = vpack.c.bf16 %v39, %v39
    %v41 = vld [vmem:[#allocation5] sm:$0xff]
    %v42 = vld [vmem:[#allocation5 + $0x8] sm:$0xff]
    %v43 = vld [vmem:[#allocation5 + $0x10] sm:$0xff]
    %v44 = vld [vmem:[#allocation5 + $0x18] sm:$0xff]
    %v45 = vld [vmem:[#allocation5 + $0x20] sm:$0xff]
    %v46 = vld [vmem:[#allocation5 + $0x28] sm:$0xff]
    %v47 = vld [vmem:[#allocation5 + $0x30] sm:$0xff]
    %v48 = vld [vmem:[#allocation5 + $0x38] sm:$0xff]
    %v49 = vld [vmem:[#allocation5 + $0x40] sm:$0xff]
    %v50 = vld [vmem:[#allocation5 + $0x48] sm:$0xff]
    %v51 = vld [vmem:[#allocation5 + $0x50] sm:$0xff]
    %v52 = vld [vmem:[#allocation5 + $0x58] sm:$0xff]
    %v53 = vld [vmem:[#allocation5 + $0x60] sm:$0xff]
    %v54 = vld [vmem:[#allocation5 + $0x68] sm:$0xff]
    %v55 = vld [vmem:[#allocation5 + $0x70] sm:$0xff]
    %v56 = vld [vmem:[#allocation5 + $0x78] sm:$0xff]
    %v57 = vld [vmem:[#allocation5 + $0x80] sm:$0xff]
    %v58 = vld [vmem:[#allocation5 + $0x88] sm:$0xff]
    %v59 = vld [vmem:[#allocation5 + $0x90] sm:$0xff]
    %v60 = vld [vmem:[#allocation5 + $0x98] sm:$0xff]
    %v61 = vld [vmem:[#allocation5 + $0xa0] sm:$0xff]
    %v62 = vld [vmem:[#allocation5 + $0xa8] sm:$0xff]
    %v63 = vld [vmem:[#allocation5 + $0xb0] sm:$0xff]
    %v64 = vld [vmem:[#allocation5 + $0xb8] sm:$0xff]
    %v65 = vld [vmem:[#allocation5 + $0xc0] sm:$0xff]
    %v66 = vld [vmem:[#allocation5 + $0xc8] sm:$0xff]
    %v67 = vld [vmem:[#allocation5 + $0xd0] sm:$0xff]
    %v68 = vld [vmem:[#allocation5 + $0xd8] sm:$0xff]
    %v69 = vld [vmem:[#allocation5 + $0xe0] sm:$0xff]
    %v70 = vld [vmem:[#allocation5 + $0xe8] sm:$0xff]
    %v71 = vld [vmem:[#allocation5 + $0xf0] sm:$0xff]
    %v72 = vld [vmem:[#allocation5 + $0xf8] sm:$0xff]
    %v105 = vunpack.c.l.b16 %v41
    %v106 = vunpack.c.h.b16 %v41
    %v107 = vunpack.c.l.b16 %v42
    %v108 = vunpack.c.h.b16 %v42
    %v109 = vunpack.c.l.b16 %v43
    %v110 = vunpack.c.h.b16 %v43
    %v111 = vunpack.c.l.b16 %v44
    %v112 = vunpack.c.h.b16 %v44
    %v113 = vunpack.c.l.b16 %v45
    %v114 = vunpack.c.h.b16 %v45
    %v115 = vunpack.c.l.b16 %v46
    %v116 = vunpack.c.h.b16 %v46
    %v117 = vunpack.c.l.b16 %v47
    %v118 = vunpack.c.h.b16 %v47
    %v119 = vunpack.c.l.b16 %v48
    %v120 = vunpack.c.h.b16 %v48
    %v121 = vunpack.c.l.b16 %v49
    %v122 = vunpack.c.h.b16 %v49
    %v123 = vunpack.c.l.b16 %v50
    %v124 = vunpack.c.h.b16 %v50
    %v125 = vunpack.c.l.b16 %v51
    %v126 = vunpack.c.h.b16 %v51
    %v127 = vunpack.c.l.b16 %v52
    %v128 = vunpack.c.h.b16 %v52
    %v129 = vunpack.c.l.b16 %v53
    %v130 = vunpack.c.h.b16 %v53
    %v131 = vunpack.c.l.b16 %v54
    %v132 = vunpack.c.h.b16 %v54
    %v133 = vunpack.c.l.b16 %v55
    %v134 = vunpack.c.h.b16 %v55
    %v135 = vunpack.c.l.b16 %v56
    %v136 = vunpack.c.h.b16 %v56
    %v137 = vunpack.c.l.b16 %v57
    %v138 = vunpack.c.h.b16 %v57
    %v139 = vunpack.c.l.b16 %v58
    %v140 = vunpack.c.h.b16 %v58
    %v141 = vunpack.c.l.b16 %v59
    %v142 = vunpack.c.h.b16 %v59
    %v143 = vunpack.c.l.b16 %v60
    %v144 = vunpack.c.h.b16 %v60
    %v145 = vunpack.c.l.b16 %v61
    %v146 = vunpack.c.h.b16 %v61
    %v147 = vunpack.c.l.b16 %v62
    %v148 = vunpack.c.h.b16 %v62
    %v149 = vunpack.c.l.b16 %v63
    %v150 = vunpack.c.h.b16 %v63
    %v151 = vunpack.c.l.b16 %v64
    %v152 = vunpack.c.h.b16 %v64
    %v153 = vunpack.c.l.b16 %v65
    %v154 = vunpack.c.h.b16 %v65
    %v155 = vunpack.c.l.b16 %v66
    %v156 = vunpack.c.h.b16 %v66
    %v157 = vunpack.c.l.b16 %v67
    %v158 = vunpack.c.h.b16 %v67
    %v159 = vunpack.c.l.b16 %v68
    %v160 = vunpack.c.h.b16 %v68
    %v161 = vunpack.c.l.b16 %v69
    %v162 = vunpack.c.h.b16 %v69
    %v163 = vunpack.c.l.b16 %v70
    %v164 = vunpack.c.h.b16 %v70
    %v165 = vunpack.c.l.b16 %v71
    %v166 = vunpack.c.h.b16 %v71
    %v167 = vunpack.c.l.b16 %v72
    %v168 = vunpack.c.h.b16 %v72
    %v169 = vpack.c.b16 %v109, %v105
    %v170 = vpack.c.b16 %v110, %v106
    %v171 = vpack.c.b16 %v111, %v107
    %v172 = vpack.c.b16 %v112, %v108
    %v173 = vpack.c.b16 %v117, %v113
    %v174 = vpack.c.b16 %v118, %v114
    %v175 = vpack.c.b16 %v119, %v115
    %v176 = vpack.c.b16 %v120, %v116
    %v177 = vpack.c.b16 %v125, %v121
    %v178 = vpack.c.b16 %v126, %v122
    %v179 = vpack.c.b16 %v127, %v123
    %v180 = vpack.c.b16 %v128, %v124
    %v181 = vpack.c.b16 %v133, %v129
    %v182 = vpack.c.b16 %v134, %v130
    %v183 = vpack.c.b16 %v135, %v131
    %v184 = vpack.c.b16 %v136, %v132
    %v185 = vpack.c.b16 %v141, %v137
    %v186 = vpack.c.b16 %v142, %v138
    %v187 = vpack.c.b16 %v143, %v139
    %v188 = vpack.c.b16 %v144, %v140
    %v189 = vpack.c.b16 %v149, %v145
    %v190 = vpack.c.b16 %v150, %v146
    %v191 = vpack.c.b16 %v151, %v147
    %v192 = vpack.c.b16 %v152, %v148
    %v193 = vpack.c.b16 %v157, %v153
    %v194 = vpack.c.b16 %v158, %v154
    %v195 = vpack.c.b16 %v159, %v155
    %v196 = vpack.c.b16 %v160, %v156
    %v197 = vpack.c.b16 %v165, %v161
    %v198 = vpack.c.b16 %v166, %v162
    %v199 = vpack.c.b16 %v167, %v163
    %v200 = vpack.c.b16 %v168, %v164
    %233 = vmatprep.subr.bf16.mxu0 %v198
    %234 = vmatpush1.bf16.msra.mxu0 %v197
    %235 = vmatprep.subr.bf16.mxu0 %v194
    %236 = vmatpush1.bf16.msra.mxu0 %v193
    %237 = vmatprep.subr.bf16.mxu0 %v190
    %238 = vmatpush1.bf16.msra.mxu0 %v189
    %239 = vmatprep.subr.bf16.mxu0 %v186
    %240 = vmatpush1.bf16.msra.mxu0 %v185
    %241 = vmatprep.subr.bf16.mxu0 %v182
    %242 = vmatpush1.bf16.msra.mxu0 %v181
    %243 = vmatprep.subr.bf16.mxu0 %v178
    %244 = vmatpush1.bf16.msra.mxu0 %v177
    %245 = vmatprep.subr.bf16.mxu0 %v174
    %246 = vmatpush1.bf16.msra.mxu0 %v173
    %247 = vmatprep.subr.bf16.mxu0 %v170
    %248 = vmatpush1.bf16.msra.mxu0 %v169
    %249 = vmatprep.subr.bf16.mxu0 0
    %250 = vmatpush2.bf16.msra.mxu0 0
    %251 = vmatprep.subr.bf16.mxu0 0
    %252 = vmatpush2.bf16.msra.mxu0 0
    %253 = vmatprep.subr.bf16.mxu0 0
    %254 = vmatpush2.bf16.msra.mxu0 0
    %255 = vmatprep.subr.bf16.mxu0 0
    %256 = vmatpush2.bf16.msra.mxu0 0
    %257 = vmatprep.subr.bf16.mxu0 0
    %258 = vmatpush2.bf16.msra.mxu0 0
    %259 = vmatprep.subr.bf16.mxu0 0
    %260 = vmatpush2.bf16.msra.mxu0 0
    %261 = vmatprep.subr.bf16.mxu0 0
    %262 = vmatpush2.bf16.msra.mxu0 0
    %263 = vmatprep.subr.bf16.mxu0 0
    %264 = vmatpush2.bf16.msra.mxu0 0
    %265 = vmatprep.mubr.bf16.mxu0 0
    %266 = vmatmul.mubr.bf16.gmra.mxu0 %v40
    %v267 = vpop.f32.mrf.mxu0
    %v268 = vadd.f32 0.0, %v267
    %v269 = vpop.f32.mrf.mxu0
    %v270 = vadd.f32 0.0, %v269
    %v271 = vpop.f32.mrf.mxu0
    %v272 = vpop.f32.mrf.mxu0
    %273 = vdwg.mxu0
    %274 = vmatprep.subr.bf16.mxu0 %v200
    %275 = vmatpush1.bf16.msra.mxu0 %v199
    %276 = vmatprep.subr.bf16.mxu0 %v196
    %277 = vmatpush1.bf16.msra.mxu0 %v195
    %278 = vmatprep.subr.bf16.mxu0 %v192
    %279 = vmatpush1.bf16.msra.mxu0 %v191
    %280 = vmatprep.subr.bf16.mxu0 %v188
    %281 = vmatpush1.bf16.msra.mxu0 %v187
    %282 = vmatprep.subr.bf16.mxu0 %v184
    %283 = vmatpush1.bf16.msra.mxu0 %v183
    %284 = vmatprep.subr.bf16.mxu0 %v180
    %285 = vmatpush1.bf16.msra.mxu0 %v179
    %286 = vmatprep.subr.bf16.mxu0 %v176
    %287 = vmatpush1.bf16.msra.mxu0 %v175
    %288 = vmatprep.subr.bf16.mxu0 %v172
    %289 = vmatpush1.bf16.msra.mxu0 %v171
    %290 = vmatprep.subr.bf16.mxu0 0
    %291 = vmatpush2.bf16.msra.mxu0 0
    %292 = vmatprep.subr.bf16.mxu0 0
    %293 = vmatpush2.bf16.msra.mxu0 0
    %294 = vmatprep.subr.bf16.mxu0 0
    %295 = vmatpush2.bf16.msra.mxu0 0
    %296 = vmatprep.subr.bf16.mxu0 0
    %297 = vmatpush2.bf16.msra.mxu0 0
    %298 = vmatprep.subr.bf16.mxu0 0
    %299 = vmatpush2.bf16.msra.mxu0 0
    %300 = vmatprep.subr.bf16.mxu0 0
    %301 = vmatpush2.bf16.msra.mxu0 0
    %302 = vmatprep.subr.bf16.mxu0 0
    %303 = vmatpush2.bf16.msra.mxu0 0
    %304 = vmatprep.subr.bf16.mxu0 0
    %305 = vmatpush2.bf16.msra.mxu0 0
    %306 = vmatprep.mubr.bf16.mxu0 0
    %307 = vmatmul.mubr.bf16.gmra.mxu0 %v40
    %v308 = vpop.f32.mrf.mxu0
    %v309 = vadd.f32 0.0, %v308
    %v310 = vpop.f32.mrf.mxu0
    %v311 = vadd.f32 0.0, %v310
    %v312 = vpop.f32.mrf.mxu0
    %v313 = vpop.f32.mrf.mxu0
    %314 = vdwg.mxu0
    %v315 = vtanh.pop %v268
    %v316 = vtanh.pop %v270
    %v317 = vtanh.pop %v309
    %v318 = vtanh.pop %v311
    %v323 = vcombine.low %v315, %v316
    %v324 = vcombine.low %v317, %v318
    %v326 = vunpack.c.l.s4 1966171168
    %v327 = vunpack.c.0.s8 %v326
    %v328 = vlaneseq
    %v329 = vshrl.u32 %v328, 7
    %v330 = vsub.s32 %v327, %v329
    %v331 = vrot.slane %v323, %v330
    %v333 = vunpack.c.l.s4 1966171168
    %v334 = vunpack.c.0.s8 %v333
    %v335 = vlaneseq
    %v336 = vshrl.u32 %v335, 7
    %v337 = vsub.s32 %v334, %v336
    %v338 = vrot.slane %v324, %v337
    %v339 = vcombine.low %v331, %v338
    %v341 = vunpack.c.l.s4 1966171168
    %v342 = vunpack.c.0.s8 %v341
    %v343 = vlaneseq
    %v344 = vshrl.u32 %v343, 7
    %v345 = vsub.s32 %v342, %v344
    %v346 = vrot.slane %v339, %v345
    %v348 = vlaneseq
    %vm349 = vcmp.ge.s32.totalorder %v348, 0
    %vm350 = vcmp.lt.s32.totalorder %v348, 512
    %vm351 = vmand %vm349, %vm350
    %352 = vst.msk [vmem:[#allocation7] sm:$0xf] %vm351, %v346
    // Predicated region
    $region18: #{tpu_custom_call.1} parent=1 // pred_check
      _
    $region19: #{tpu_custom_call.1} parent=1 // pred_check_branch
      %354 = sbr.rel (0) target = $region21
    $region20: #{tpu_custom_call.1} parent=1 // pred_region
      %s356 = ssub.s32 64, 64
      %357 = vsyncadd [#allocation4], %s356
      %s359 = sshll.u32 [#allocation7], 4
      %s360 = int_to_ptr.vmem [resolvable:$true] %s359
      %362 = dma.vmem_to_hbm [thread:$0]  %s360, 64, %s2, [#allocation4]
    $region21: #{tpu_custom_call.1} parent=1 // pred_fallthru
      _
    // Predicated region
    $region22: #{tpu_custom_call.1} parent=1 // pred_check
      _
    $region23: #{tpu_custom_call.1} parent=1 // pred_check_branch
      %364 = sbr.rel (0) target = $region25
    $region24: #{tpu_custom_call.1} parent=1 // pred_region
      %365 = dma.done [#allocation4], 64
    $region25: #{tpu_custom_call.1} parent=1 // pred_fallthru
      _
    %366 = vsyncpa [#allocation3], 1
    %367 = vsyncpa [#allocation6], 1
    %368 = vsyncpa [#allocation4], 1

</llo_original>
